<compile_context>
chip_gen: v5e
topology: v5e:2x2
jax: 0.10.0
libtpu: 0.0.40
codegen_flags: <defaults>
</compile_context>

<pallas_src>
import functools

import jax
import jax.numpy as jnp
import numpy as np
from jax.experimental import pallas as pl
from jax.experimental.pallas import tpu as pltpu

LANE = 128
SUBLANE = 8


def _round_up(x: int, m: int) -> int:
    return ((x + m - 1) // m) * m


def _make_mlp_kernel(n_hidden: int, use_sigmoid: bool, compute_dtype):
    """Kernel refs: (x, w0, b0, ..., w_last, b_last, out).

    Hidden matmuls hit the MXU with f32 accumulation; LeakyReLU runs in f32 on
    the VPU.  The final layer is an A @ B^T matmul (w_row contracted against
    h's feature dim), which leaves the per-row logits lane-dense in a (1, tm)
    row so the store is unmasked and tiny, and the sigmoid only sees tm values.
    """

    def kernel(x_ref, *refs):
        out_ref = refs[-1]
        params = refs[:-1]

        h = x_ref[...].astype(compute_dtype)          # in-kernel cast (free VPU)
        for i in range(n_hidden):
            w = params[2 * i][...]
            b = params[2 * i + 1][...]                # (1, width) f32
            h = jnp.dot(h, w, preferred_element_type=jnp.float32) + b
            # LeakyReLU(0.2); Dropout(0.5) is identity in eval mode.
            h = jnp.where(h > 0, h, 0.2 * h)
            h = h.astype(compute_dtype)

        w_last = params[2 * n_hidden][...]            # (8, K); row 0 real
        b_last = params[2 * n_hidden + 1][...]        # (1, 1) f32
        # (8, tm) = w_last @ h^T on the MXU (rhs contracted on its last dim).
        z = jax.lax.dot_general(
            w_last, h,
            dimension_numbers=(((1,), (1,)), ((), ())),
            preferred_element_type=jnp.float32)
        z0 = z[0:1, :] + b_last                       # (1, tm) lane-dense logits
        if use_sigmoid:
            z0 = 1.0 / (1.0 + jnp.exp(-z0))           # exp on EUP; tm values only
        out_ref[...] = z0.astype(out_ref.dtype)

    return kernel


def discriminator_forward(x, params, *, pac, pacdim, use_sigmoid,
                          compute_dtype=jnp.bfloat16, tile_m=2048):
    """params: list of (W, b) with W shape (in, out), b shape (1, out)."""
    assert x.shape[0] % pac == 0
    rows = x.shape[0] // pac
    x2 = x.reshape(rows, pacdim)                      # contiguous view, no copy

    n_hidden = len(params) - 1
    assert params[-1][0].shape[1] == 1

    # --- Pad parameters (exact).  Hidden widths -> 128-lane multiples; final
    #     layer stored transposed as an (8, K) row block (rows 1..7 zero). ----
    padded_params = []
    prev = pacdim
    for li, (w, b) in enumerate(params):
        fan_in, fan_out = w.shape
        if li < n_hidden:
            out_pad = _round_up(fan_out, LANE)
            w_p = jnp.zeros((prev, out_pad), compute_dtype)
            w_p = w_p.at[:fan_in, :fan_out].set(w.astype(compute_dtype))
            b_p = jnp.zeros((1, out_pad), jnp.float32)
            b_p = b_p.at[:, :fan_out].set(b.astype(jnp.float32))
            prev = out_pad
        else:
            w_p = jnp.zeros((SUBLANE, prev), compute_dtype)
            w_p = w_p.at[0, :fan_in].set(w[:, 0].astype(compute_dtype))
            b_p = b.reshape(1, 1).astype(jnp.float32)
        padded_params.append((w_p, b_p))

    # --- Row tiling: sublane-align (<= 7 padded rows), pl.cdiv grid, keep at
    #     least 2 grid steps when the problem is big enough (v7x dual TC). ----
    rows8 = _round_up(rows, SUBLANE)
    if rows8 != rows:
        x2 = jnp.pad(x2, ((0, rows8 - rows), (0, 0)))
    tm = min(tile_m, rows8)
    if tm == rows8 and rows8 > 256:
        tm = _round_up(pl.cdiv(rows8, 2), SUBLANE)
    grid_m = pl.cdiv(rows8, tm)

    # --- Specs: x/out tiled over rows, params resident (constant index). ----
    in_specs = [pl.BlockSpec((tm, pacdim), lambda i: (i, 0))]
    flat_params = []
    for (w_p, b_p) in padded_params:
        flat_params += [w_p, b_p]
        in_specs.append(pl.BlockSpec(w_p.shape, lambda i: (0, 0)))
        in_specs.append(pl.BlockSpec(b_p.shape, lambda i: (0, 0)))
    # Lane-dense packed output: one (1, tm) f32 row per grid step.
    out_specs = pl.BlockSpec((None, 1, tm), lambda i: (i, 0, 0))
    out_shape = jax.ShapeDtypeStruct((int(grid_m), 1, tm), jnp.float32)

    # --- Advisory cost estimate for the XLA scheduler. -----------------------
    flops = 2 * rows8 * sum(int(w_p.size) for w_p, _ in padded_params)
    transcendentals = rows8 if use_sigmoid else 0
    bytes_accessed = (
        int(x2.size) * x2.dtype.itemsize
        + sum(int(w_p.size) * w_p.dtype.itemsize
              + int(b_p.size) * b_p.dtype.itemsize
              for w_p, b_p in padded_params)
        + int(grid_m) * tm * 4)

    kernel = _make_mlp_kernel(n_hidden, use_sigmoid, compute_dtype)
    out = pl.pallas_call(
        kernel,
        out_shape=out_shape,
        grid_spec=pltpu.PrefetchScalarGridSpec(
            num_scalar_prefetch=0,
            grid=(int(grid_m),),
            in_specs=in_specs,
            out_specs=out_specs,
        ),
        compiler_params=pltpu.CompilerParams(
            dimension_semantics=("parallel",)),
        cost_estimate=pl.CostEstimate(
            flops=flops,
            transcendentals=transcendentals,
            bytes_accessed=bytes_accessed),
    )(x2, *flat_params)

    # Packed (grid, 1, tm) -> (rows, 1); only rows*4 bytes are touched here.
    return out.reshape(-1)[:rows].reshape(rows, 1)


def init_discriminator_params(key, input_dim, discriminator_dim, pac):
    """Deterministic parameter init (uniform ~ PyTorch Linear default)."""
    pacdim = input_dim * pac
    dims = [pacdim] + list(discriminator_dim) + [1]
    params = []
    for i in range(len(dims) - 1):
        fan_in, fan_out = dims[i], dims[i + 1]
        key, kw, kb = jax.random.split(key, 3)
        bound = 1.0 / np.sqrt(fan_in)
        w = jax.random.uniform(kw, (fan_in, fan_out), jnp.float32, -bound, bound)
        b = jax.random.uniform(kb, (1, fan_out), jnp.float32, -bound, bound)
        params.append((w, b))
    return params, pacdim


def _reference_forward(x, params, *, pacdim, use_sigmoid,
                       compute_dtype=jnp.float32):
    """Plain-JAX reference mirroring the kernel's dtype handling."""
    h = x.reshape(-1, pacdim).astype(jnp.float32)
    n_layers = len(params)
    for i, (w, b) in enumerate(params):
        h = jnp.dot(h.astype(compute_dtype), w.astype(compute_dtype),
                    preferred_element_type=jnp.float32) + b.astype(jnp.float32)
        if i < n_layers - 1:
            h = jnp.where(h > 0, h, 0.2 * h)
    if use_sigmoid:
        h = 1.0 / (1.0 + jnp.exp(-h))
    return h


if __name__ == "__main__":
    # Shapes consistent with the module: input_dim=16, pac=10,
    # discriminator_dim=(64, 32), loss='cross_entropy' -> final Sigmoid.
    input_dim = 16
    pac = 10
    discriminator_dim = (64, 32)
    use_sigmoid = True  # loss == 'cross_entropy'

    key = jax.random.PRNGKey(0)
    key, kx = jax.random.split(key)
    params, pacdim = init_discriminator_params(key, input_dim, discriminator_dim, pac)

    fwd = functools.partial(
        discriminator_forward, pac=pac, pacdim=pacdim, use_sigmoid=use_sigmoid)

    # 1) Tiny batch, exact f32 path (single tile).
    batch = 40
    x = jax.random.normal(kx, (batch, input_dim), jnp.float32)
    out_f32 = jax.block_until_ready(fwd(x, params, compute_dtype=jnp.float32))
    ref_f32 = _reference_forward(x, params, pacdim=pacdim,
                                 use_sigmoid=use_sigmoid,
                                 compute_dtype=jnp.float32)
    np.testing.assert_allclose(np.asarray(out_f32), np.asarray(ref_f32),
                               rtol=1e-5, atol=1e-5)
    assert out_f32.shape == (batch // pac, 1)

    # 2) Larger batch, default bf16 MXU path -> grid of 2 "parallel" row tiles.
    batch2 = 7000
    key, kx2 = jax.random.split(key)
    x_big = jax.random.normal(kx2, (batch2, input_dim), jnp.float32)
    out_bf16 = jax.block_until_ready(fwd(x_big, params))
    ref_bf16 = _reference_forward(x_big, params, pacdim=pacdim,
                                  use_sigmoid=use_sigmoid,
                                  compute_dtype=jnp.bfloat16)
    np.testing.assert_allclose(np.asarray(out_bf16), np.asarray(ref_bf16),
                               rtol=5e-3, atol=5e-3)
    assert out_bf16.shape == (batch2 // pac, 1)

    # 3) Same batch with a small tile -> 3 grid steps incl. a partial last tile.
    out_small_tile = jax.block_until_ready(fwd(x_big, params, tile_m=256))
    np.testing.assert_allclose(np.asarray(out_small_tile), np.asarray(ref_bf16),
                               rtol=5e-3, atol=5e-3)

    print("KERNEL_OK")
</pallas_src>

<mosaic_0001>
module attributes {stable_mosaic.version = 11 : i64} {
  func.func @kernel(%arg0: i32, %arg1: memref<8x160xf32, #tpu.memory_space<vmem>>, %arg2: memref<160x128xf32, #tpu.memory_space<vmem>>, %arg3: memref<1x128xf32, #tpu.memory_space<vmem>>, %arg4: memref<128x128xf32, #tpu.memory_space<vmem>>, %arg5: memref<1x128xf32, #tpu.memory_space<vmem>>, %arg6: memref<8x128xf32, #tpu.memory_space<vmem>>, %arg7: memref<1x1xf32, #tpu.memory_space<vmem>>, %arg8: memref<1x1x8xf32, #tpu.memory_space<vmem>>) attributes {dimension_semantics = [#tpu.dimension_semantics<parallel>], iteration_bounds = array<i64: 1>, scalar_prefetch = 0 : i64, scratch_operands = 0 : i64, tpu.core_type = #tpu.core_type<tc>, window_params = [{transform_indices = @transform_0, window_bounds = array<i64: 8, 160>}, {pipeline_mode = #tpu.pipeline_mode<synchronous>, transform_indices = @transform_1, window_bounds = array<i64: 160, 128>}, {pipeline_mode = #tpu.pipeline_mode<synchronous>, transform_indices = @transform_2, window_bounds = array<i64: 1, 128>}, {pipeline_mode = #tpu.pipeline_mode<synchronous>, transform_indices = @transform_3, window_bounds = array<i64: 128, 128>}, {pipeline_mode = #tpu.pipeline_mode<synchronous>, transform_indices = @transform_4, window_bounds = array<i64: 1, 128>}, {pipeline_mode = #tpu.pipeline_mode<synchronous>, transform_indices = @transform_5, window_bounds = array<i64: 8, 128>}, {pipeline_mode = #tpu.pipeline_mode<synchronous>, transform_indices = @transform_6, window_bounds = array<i64: 1, 1>}, {transform_indices = @transform_7, window_bounds = array<i64: 1, 1, 8>}]} {
    %c0 = arith.constant 0 : index
    %c0_0 = arith.constant 0 : index
    %0 = vector.load %arg1[%c0, %c0_0] : memref<8x160xf32, #tpu.memory_space<vmem>>, vector<8x160xf32>
    %c0_1 = arith.constant 0 : index
    %c0_2 = arith.constant 0 : index
    %1 = vector.load %arg2[%c0_1, %c0_2] : memref<160x128xf32, #tpu.memory_space<vmem>>, vector<160x128xf32>
    %c0_3 = arith.constant 0 : index
    %c0_4 = arith.constant 0 : index
    %2 = vector.load %arg3[%c0_3, %c0_4] : memref<1x128xf32, #tpu.memory_space<vmem>>, vector<1x128xf32>
    %cst = arith.constant dense<0.000000e+00> : vector<8x128xf32>
    %3 = tpu.matmul %0, %1, %cst {dimension_numbers = #tpu.dot_dimension_numbers<[1], [0], [0], [1], [0, 0, 1, 1], [], []>} : vector<8x160xf32>, vector<160x128xf32>, vector<8x128xf32> -> vector<8x128xf32>
    %4 = vector.broadcast %2 : vector<1x128xf32> to vector<8x128xf32>
    %5 = arith.addf %3, %4 : vector<8x128xf32>
    %cst_5 = arith.constant 0.000000e+00 : f32
    %6 = vector.broadcast %cst_5 : f32 to vector<8x128xf32>
    %7 = arith.cmpf ogt, %5, %6 : vector<8x128xf32>
    %cst_6 = arith.constant 2.000000e-01 : f32
    %8 = vector.broadcast %cst_6 : f32 to vector<8x128xf32>
    %9 = arith.mulf %8, %5 : vector<8x128xf32>
    %10 = arith.select %7, %5, %9 : vector<8x128xi1>, vector<8x128xf32>
    %c0_7 = arith.constant 0 : index
    %c0_8 = arith.constant 0 : index
    %11 = vector.load %arg4[%c0_7, %c0_8] : memref<128x128xf32, #tpu.memory_space<vmem>>, vector<128x128xf32>
    %c0_9 = arith.constant 0 : index
    %c0_10 = arith.constant 0 : index
    %12 = vector.load %arg5[%c0_9, %c0_10] : memref<1x128xf32, #tpu.memory_space<vmem>>, vector<1x128xf32>
    %cst_11 = arith.constant dense<0.000000e+00> : vector<8x128xf32>
    %13 = tpu.matmul %10, %11, %cst_11 {dimension_numbers = #tpu.dot_dimension_numbers<[1], [0], [0], [1], [0, 0, 1, 1], [], []>} : vector<8x128xf32>, vector<128x128xf32>, vector<8x128xf32> -> vector<8x128xf32>
    %14 = vector.broadcast %12 : vector<1x128xf32> to vector<8x128xf32>
    %15 = arith.addf %13, %14 : vector<8x128xf32>
    %cst_12 = arith.constant 0.000000e+00 : f32
    %16 = vector.broadcast %cst_12 : f32 to vector<8x128xf32>
    %17 = arith.cmpf ogt, %15, %16 : vector<8x128xf32>
    %cst_13 = arith.constant 2.000000e-01 : f32
    %18 = vector.broadcast %cst_13 : f32 to vector<8x128xf32>
    %19 = arith.mulf %18, %15 : vector<8x128xf32>
    %20 = arith.select %17, %15, %19 : vector<8x128xi1>, vector<8x128xf32>
    %c0_14 = arith.constant 0 : index
    %c0_15 = arith.constant 0 : index
    %21 = vector.load %arg6[%c0_14, %c0_15] : memref<8x128xf32, #tpu.memory_space<vmem>>, vector<8x128xf32>
    %c0_16 = arith.constant 0 : index
    %c0_17 = arith.constant 0 : index
    %22 = vector.load %arg7[%c0_16, %c0_17] : memref<1x1xf32, #tpu.memory_space<vmem>>, vector<1x1xf32>
    %cst_18 = arith.constant dense<0.000000e+00> : vector<8x8xf32>
    %23 = tpu.matmul %21, %20, %cst_18 {dimension_numbers = #tpu.dot_dimension_numbers<[1], [1], [0], [0], [0, 0, 1, 0], [], []>} : vector<8x128xf32>, vector<8x128xf32>, vector<8x8xf32> -> vector<8x8xf32>
    %24 = vector.extract_strided_slice %23 {offsets = [0, 0], sizes = [1, 8], strides = [1, 1]} : vector<8x8xf32> to vector<1x8xf32>
    %25 = vector.broadcast %22 : vector<1x1xf32> to vector<1x8xf32>
    %26 = arith.addf %24, %25 : vector<1x8xf32>
    %cst_19 = arith.constant 0.000000e+00 : f32
    %27 = vector.broadcast %cst_19 : f32 to vector<1x8xf32>
    %28 = arith.subf %27, %26 : vector<1x8xf32>
    %29 = math.exp %28 : vector<1x8xf32>
    %cst_20 = arith.constant 1.000000e+00 : f32
    %30 = vector.broadcast %cst_20 : f32 to vector<1x8xf32>
    %31 = arith.addf %30, %29 : vector<1x8xf32>
    %cst_21 = arith.constant 1.000000e+00 : f32
    %32 = vector.broadcast %cst_21 : f32 to vector<1x8xf32>
    %33 = arith.divf %32, %31 : vector<1x8xf32>
    %c0_22 = arith.constant 0 : index
    %c0_23 = arith.constant 0 : index
    %c0_24 = arith.constant 0 : index
    %34 = vector.load %arg8[%c0_22, %c0_23, %c0_24] : memref<1x1x8xf32, #tpu.memory_space<vmem>>, vector<1x1x8xf32>
    %35 = vector.shape_cast %34 : vector<1x1x8xf32> to vector<1x8xf32>
    %36 = vector.shape_cast %33 : vector<1x8xf32> to vector<1x1x8xf32>
    tpu.vector_store %arg8[%c0_22, %c0_23, %c0_24], %36 {strides = array<i32>} : memref<1x1x8xf32, #tpu.memory_space<vmem>>, vector<1x1x8xf32>,
    return
  }
  func.func @transform_0(%arg0: i32) -> (i32, i32) {
    %c0_i32 = arith.constant 0 : i32
    %c0_i32_0 = arith.constant 0 : i32
    return %arg0, %c0_i32 : i32, i32
  }
  func.func @transform_1(%arg0: i32) -> (i32, i32) {
    %c0_i32 = arith.constant 0 : i32
    %c0_i32_0 = arith.constant 0 : i32
    %c0_i32_1 = arith.constant 0 : i32
    return %c0_i32, %c0_i32_0 : i32, i32
  }
  func.func @transform_2(%arg0: i32) -> (i32, i32) {
    %c0_i32 = arith.constant 0 : i32
    %c0_i32_0 = arith.constant 0 : i32
    %c0_i32_1 = arith.constant 0 : i32
    return %c0_i32, %c0_i32_0 : i32, i32
  }
  func.func @transform_3(%arg0: i32) -> (i32, i32) {
    %c0_i32 = arith.constant 0 : i32
    %c0_i32_0 = arith.constant 0 : i32
    %c0_i32_1 = arith.constant 0 : i32
    return %c0_i32, %c0_i32_0 : i32, i32
  }
  func.func @transform_4(%arg0: i32) -> (i32, i32) {
    %c0_i32 = arith.constant 0 : i32
    %c0_i32_0 = arith.constant 0 : i32
    %c0_i32_1 = arith.constant 0 : i32
    return %c0_i32, %c0_i32_0 : i32, i32
  }
  func.func @transform_5(%arg0: i32) -> (i32, i32) {
    %c0_i32 = arith.constant 0 : i32
    %c0_i32_0 = arith.constant 0 : i32
    %c0_i32_1 = arith.constant 0 : i32
    return %c0_i32, %c0_i32_0 : i32, i32
  }
  func.func @transform_6(%arg0: i32) -> (i32, i32) {
    %c0_i32 = arith.constant 0 : i32
    %c0_i32_0 = arith.constant 0 : i32
    %c0_i32_1 = arith.constant 0 : i32
    return %c0_i32, %c0_i32_0 : i32, i32
  }
  func.func @transform_7(%arg0: i32) -> (i32, i32, i32) {
    %c0_i32 = arith.constant 0 : i32
    %c0_i32_0 = arith.constant 0 : i32
    %c0_i32_1 = arith.constant 0 : i32
    return %arg0, %c0_i32, %c0_i32_0 : i32, i32, i32
  }
}

</mosaic_0001>

<llo_original>
// kernel: tpu_custom_call.1
$region0: #{tpu_custom_call.1}
  #allocation0 [shape = 'u32[]', space=smem, size = 0x4, offset = 0x4, fixed_abs, tag = 'smem constant byte address 0x4 - core index']
  #allocation1 [shape = 'u32[72,128]{1,0:T(1,128)}', space=vmem, size = 0x9000, scoped, tag = 'internal scratch']
  #allocation2 [shape = 'f32[1,1]{1,0:T(1,128)S(1)}', space=vmem, size = 0x200, scoped, tag = 'scoped memory for tpu_custom_call.1']
  %s0 = inlined_call_operand.hbm [shape: f32[8,160], index: 0, kind: input, shape index: {}]
  %s1 = inlined_call_operand.hbm [shape: f32[160,128], index: 1, kind: input, shape index: {}]
  %s2 = inlined_call_operand.vmem [shape: f32[1,128], index: 2, kind: input, shape index: {}]
  %s3 = inlined_call_operand.hbm [shape: f32[128,128], index: 3, kind: input, shape index: {}]
  %s4 = inlined_call_operand.vmem [shape: f32[1,128], index: 4, kind: input, shape index: {}]
  %s5 = inlined_call_operand.hbm [shape: f32[8,128], index: 5, kind: input, shape index: {}]
  %s6 = inlined_call_operand.<no memory space> [shape: f32[1,1], index: 6, kind: input, shape index: {}]
  %s7 = inlined_call_operand.hbm [shape: f32[1,1,8], index: 7, kind: output, shape index: {}]
  %s8 = sld [smem:[#allocation0]]
  $region54: #{tpu_custom_call.1} parent=0
    _
  %s10 = ssub.s32 1, %s8
  %s11 = scalar_select 0, %s10, %s8
  %v12 = vstv %s6
  %13 = vst [vmem:[#allocation2] sm:$0x1] %v12
  $region1: #{tpu_custom_call.1} parent=0
    #allocation3 [shape = 'u8[8192]{0}', space=vmem, size = 0x2000, scoped, tag = 'input window, operand 0, single buffered']
    #allocation4 [shape = 's32[1]{0}', space=sflag, size = 0x4, scoped, tag = 'scoped memory for tpu_custom_call.1']
    #allocation5 [shape = 's32[1]{0}', space=sflag, size = 0x4, scoped, tag = 'scoped memory for tpu_custom_call.1']
    #allocation6 [shape = 'u8[81920]{0}', space=vmem, size = 0x14000, scoped, tag = 'input window, operand 1, single buffered']
    #allocation7 [shape = 's32[1]{0}', space=sflag, size = 0x4, scoped, tag = 'scoped memory for tpu_custom_call.1']
    #allocation8 [shape = 'u8[65536]{0}', space=vmem, size = 0x10000, scoped, tag = 'input window, operand 3, single buffered']
    #allocation9 [shape = 'u8[4096]{0}', space=vmem, size = 0x1000, scoped, tag = 'input window, operand 5, single buffered']
    #allocation10 [shape = 's32[1]{0}', space=sflag, size = 0x4, scoped, tag = 'scoped memory for tpu_custom_call.1']
    #allocation11 [shape = 'u8[512]{0}', space=vmem, size = 0x400, scoped, tag = 'output window, operand 0, single buffered']
    %14 = vsyncpa [#allocation4], 0
    %15 = vsyncpa [#allocation7], 0
    %16 = vsyncpa [#allocation10], 0
    %17 = vsyncpa [#allocation5], 0
    // Predicated region
    $region2: #{tpu_custom_call.1} parent=1 // pred_check
      _
    $region3: #{tpu_custom_call.1} parent=1 // pred_check_branch
      %19 = sbr.rel (0) target = $region5
    $region4: #{tpu_custom_call.1} parent=1 // pred_region
      %21 = vsyncadd [#allocation4], 0
      %s23 = sshll.u32 %s0, 4
      %s24 = int_to_ptr.hbm [resolvable:$true] %s23
      %s25 = sshll.u32 [#allocation3], 4
      %s26 = int_to_ptr.vmem [resolvable:$true] %s25
      %28 = dma.hbm_to_vmem [thread:$0]  %s24, 256, %s26, [#allocation4]
    $region5: #{tpu_custom_call.1} parent=1 // pred_fallthru
      _
    // Predicated region
    $region6: #{tpu_custom_call.1} parent=1 // pred_check
      _
    $region7: #{tpu_custom_call.1} parent=1 // pred_check_branch
      %30 = sbr.rel (0) target = $region9
    $region8: #{tpu_custom_call.1} parent=1 // pred_region
      %32 = vsyncadd [#allocation7], 0
      %s33 = sshll.u32 %s1, 4
      %s34 = int_to_ptr.hbm [resolvable:$true] %s33
      %s35 = sshll.u32 [#allocation6], 4
      %s36 = int_to_ptr.vmem [resolvable:$true] %s35
      %41 = dma.hbm_to_vmem [thread:$0]  %s34, 2560, %s36, [#allocation7], 128, 128, 8
    $region9: #{tpu_custom_call.1} parent=1 // pred_fallthru
      _
    // Predicated region
    $region10: #{tpu_custom_call.1} parent=1 // pred_check
      _
    $region11: #{tpu_custom_call.1} parent=1 // pred_check_branch
      %43 = sbr.rel (0) target = $region13
    $region12: #{tpu_custom_call.1} parent=1 // pred_region
      _
    $region13: #{tpu_custom_call.1} parent=1 // pred_fallthru
      _
    // Predicated region
    $region14: #{tpu_custom_call.1} parent=1 // pred_check
      _
    $region15: #{tpu_custom_call.1} parent=1 // pred_check_branch
      %45 = sbr.rel (0) target = $region17
    $region16: #{tpu_custom_call.1} parent=1 // pred_region
      %47 = vsyncadd [#allocation7], 0
      %s48 = sshll.u32 %s3, 4
      %s49 = int_to_ptr.hbm [resolvable:$true] %s48
      %s50 = sshll.u32 [#allocation8], 4
      %s51 = int_to_ptr.vmem [resolvable:$true] %s50
      %56 = dma.hbm_to_vmem [thread:$0]  %s49, 2048, %s51, [#allocation7], 128, 128, 8
    $region17: #{tpu_custom_call.1} parent=1 // pred_fallthru
      _
    // Predicated region
    $region18: #{tpu_custom_call.1} parent=1 // pred_check
      _
    $region19: #{tpu_custom_call.1} parent=1 // pred_check_branch
      %58 = sbr.rel (0) target = $region21
    $region20: #{tpu_custom_call.1} parent=1 // pred_region
      _
    $region21: #{tpu_custom_call.1} parent=1 // pred_fallthru
      _
    // Predicated region
    $region22: #{tpu_custom_call.1} parent=1 // pred_check
      _
    $region23: #{tpu_custom_call.1} parent=1 // pred_check_branch
      %60 = sbr.rel (0) target = $region25
    $region24: #{tpu_custom_call.1} parent=1 // pred_region
      %62 = vsyncadd [#allocation10], 0
      %s64 = sshll.u32 %s5, 4
      %s65 = int_to_ptr.hbm [resolvable:$true] %s64
      %s66 = sshll.u32 [#allocation9], 4
      %s67 = int_to_ptr.vmem [resolvable:$true] %s66
      %69 = dma.hbm_to_vmem [thread:$0]  %s65, 128, %s67, [#allocation10]
    $region25: #{tpu_custom_call.1} parent=1 // pred_fallthru
      _
    // Predicated region
    $region26: #{tpu_custom_call.1} parent=1 // pred_check
      _
    $region27: #{tpu_custom_call.1} parent=1 // pred_check_branch
      %71 = sbr.rel (0) target = $region29
    $region28: #{tpu_custom_call.1} parent=1 // pred_region
      _
    $region29: #{tpu_custom_call.1} parent=1 // pred_fallthru
      _
    // Predicated region
    $region30: #{tpu_custom_call.1} parent=1 // pred_check
      _
    $region31: #{tpu_custom_call.1} parent=1 // pred_check_branch
      %73 = sbr.rel (0) target = $region33
    $region32: #{tpu_custom_call.1} parent=1 // pred_region
      %75 = dma.done [#allocation4], 256
    $region33: #{tpu_custom_call.1} parent=1 // pred_fallthru
      _
    // Predicated region
    $region34: #{tpu_custom_call.1} parent=1 // pred_check
      _
    $region35: #{tpu_custom_call.1} parent=1 // pred_check_branch
      %77 = sbr.rel (0) target = $region37
    $region36: #{tpu_custom_call.1} parent=1 // pred_region
      %79 = dma.done [#allocation7], 2560
    $region37: #{tpu_custom_call.1} parent=1 // pred_fallthru
      _
    // Predicated region
    $region38: #{tpu_custom_call.1} parent=1 // pred_check
      _
    $region39: #{tpu_custom_call.1} parent=1 // pred_check_branch
      %81 = sbr.rel (0) target = $region41
    $region40: #{tpu_custom_call.1} parent=1 // pred_region
      %83 = dma.done [#allocation7], 2048
    $region41: #{tpu_custom_call.1} parent=1 // pred_fallthru
      _
    // Predicated region
    $region42: #{tpu_custom_call.1} parent=1 // pred_check
      _
    $region43: #{tpu_custom_call.1} parent=1 // pred_check_branch
      %85 = sbr.rel (0) target = $region45
    $region44: #{tpu_custom_call.1} parent=1 // pred_region
      %87 = dma.done [#allocation10], 128
    $region45: #{tpu_custom_call.1} parent=1 // pred_fallthru
      _
    %v88 = vld [vmem:[#allocation3] sm:$0xff]
    %v89 = vld [vmem:[#allocation3 + $0x8] sm:$0xff]
    %v90 = vld [vmem:[#allocation6] sm:$0xff]
    %v91 = vld [vmem:[#allocation6 + $0x8] sm:$0xff]
    %v92 = vld [vmem:[#allocation6 + $0x10] sm:$0xff]
    %v93 = vld [vmem:[#allocation6 + $0x18] sm:$0xff]
    %v94 = vld [vmem:[#allocation6 + $0x20] sm:$0xff]
    %v95 = vld [vmem:[#allocation6 + $0x28] sm:$0xff]
    %v96 = vld [vmem:[#allocation6 + $0x30] sm:$0xff]
    %v97 = vld [vmem:[#allocation6 + $0x38] sm:$0xff]
    %v98 = vld [vmem:[#allocation6 + $0x40] sm:$0xff]
    %v99 = vld [vmem:[#allocation6 + $0x48] sm:$0xff]
    %v100 = vld [vmem:[#allocation6 + $0x50] sm:$0xff]
    %v101 = vld [vmem:[#allocation6 + $0x58] sm:$0xff]
    %v102 = vld [vmem:[#allocation6 + $0x60] sm:$0xff]
    %v103 = vld [vmem:[#allocation6 + $0x68] sm:$0xff]
    %v104 = vld [vmem:[#allocation6 + $0x70] sm:$0xff]
    %v105 = vld [vmem:[#allocation6 + $0x78] sm:$0xff]
    %v106 = vld [vmem:[#allocation6 + $0x80] sm:$0xff]
    %v107 = vld [vmem:[#allocation6 + $0x88] sm:$0xff]
    %v108 = vld [vmem:[#allocation6 + $0x90] sm:$0xff]
    %v109 = vld [vmem:[#allocation6 + $0x98] sm:$0xff]
    %v110 = vld [vmem:[%s2] sm:$0x1]
    %v112 = vperm.slane %v110, 0
    %vm114 = vcmask 261120
    %v116 = vsel %vm114, %v89, 0
    %118 = vmatpush.msra.mxu0 %v105
    %119 = vmatpush.msra.mxu0 %v104
    %120 = vmatpush.msra.mxu0 %v103
    %121 = vmatpush.msra.mxu0 %v102
    %122 = vmatpush.msra.mxu0 %v101
    %123 = vmatpush.msra.mxu0 %v100
    %124 = vmatpush.msra.mxu0 %v99
    %125 = vmatpush.msra.mxu0 %v98
    %126 = vmatpush.msra.mxu0 %v97
    %127 = vmatpush.msra.mxu0 %v96
    %128 = vmatpush.msra.mxu0 %v95
    %129 = vmatpush.msra.mxu0 %v94
    %130 = vmatpush.msra.mxu0 %v93
    %131 = vmatpush.msra.mxu0 %v92
    %132 = vmatpush.msra.mxu0 %v91
    %133 = vmatpush.msra.mxu0 %v90
    %134 = vmatmul.f32.gmra.mxu0 %v88
    %v135 = vpop.f32.mrf.mxu0
    %v136 = vadd.f32 %v112, %v135
    %137 = vdwg.mxu0
    %138 = vmatpush.msra.mxu0 0.0
    %139 = vmatpush.msra.mxu0 0.0
    %140 = vmatpush.msra.mxu0 0.0
    %141 = vmatpush.msra.mxu0 0.0
    %142 = vmatpush.msra.mxu0 0.0
    %143 = vmatpush.msra.mxu0 0.0
    %144 = vmatpush.msra.mxu0 0.0
    %145 = vmatpush.msra.mxu0 0.0
    %146 = vmatpush.msra.mxu0 0.0
    %147 = vmatpush.msra.mxu0 0.0
    %148 = vmatpush.msra.mxu0 0.0
    %149 = vmatpush.msra.mxu0 0.0
    %150 = vmatpush.msra.mxu0 %v109
    %151 = vmatpush.msra.mxu0 %v108
    %152 = vmatpush.msra.mxu0 %v107
    %153 = vmatpush.msra.mxu0 %v106
    %154 = vmatmul.f32.gmra.mxu0 %v116
    %v155 = vpop.f32.mrf.mxu0
    %v156 = vadd.f32 %v136, %v155
    %157 = vdwg.mxu0
    %vm158 = vcmp.gt.f32.partialorder %v156, 0.0
    %v159 = vmul.f32 %v156, 0.2
    %v160 = vsel %vm158, %v156, %v159
    %v161 = vld [vmem:[#allocation8] sm:$0xff]
    %v162 = vld [vmem:[#allocation8 + $0x8] sm:$0xff]
    %v163 = vld [vmem:[#allocation8 + $0x10] sm:$0xff]
    %v164 = vld [vmem:[#allocation8 + $0x18] sm:$0xff]
    %v165 = vld [vmem:[#allocation8 + $0x20] sm:$0xff]
    %v166 = vld [vmem:[#allocation8 + $0x28] sm:$0xff]
    %v167 = vld [vmem:[#allocation8 + $0x30] sm:$0xff]
    %v168 = vld [vmem:[#allocation8 + $0x38] sm:$0xff]
    %v169 = vld [vmem:[#allocation8 + $0x40] sm:$0xff]
    %v170 = vld [vmem:[#allocation8 + $0x48] sm:$0xff]
    %v171 = vld [vmem:[#allocation8 + $0x50] sm:$0xff]
    %v172 = vld [vmem:[#allocation8 + $0x58] sm:$0xff]
    %v173 = vld [vmem:[#allocation8 + $0x60] sm:$0xff]
    %v174 = vld [vmem:[#allocation8 + $0x68] sm:$0xff]
    %v175 = vld [vmem:[#allocation8 + $0x70] sm:$0xff]
    %v176 = vld [vmem:[#allocation8 + $0x78] sm:$0xff]
    %v177 = vld [vmem:[%s4] sm:$0x1]
    %v179 = vperm.slane %v177, 0
    %181 = vmatpush.msra.mxu0 %v176
    %182 = vmatpush.msra.mxu0 %v175
    %183 = vmatpush.msra.mxu0 %v174
    %184 = vmatpush.msra.mxu0 %v173
    %185 = vmatpush.msra.mxu0 %v172
    %186 = vmatpush.msra.mxu0 %v171
    %187 = vmatpush.msra.mxu0 %v170
    %188 = vmatpush.msra.mxu0 %v169
    %189 = vmatpush.msra.mxu0 %v168
    %190 = vmatpush.msra.mxu0 %v167
    %191 = vmatpush.msra.mxu0 %v166
    %192 = vmatpush.msra.mxu0 %v165
    %193 = vmatpush.msra.mxu0 %v164
    %194 = vmatpush.msra.mxu0 %v163
    %195 = vmatpush.msra.mxu0 %v162
    %196 = vmatpush.msra.mxu0 %v161
    %197 = vmatmul.f32.gmra.mxu0 %v160
    %v198 = vpop.f32.mrf.mxu0
    %v199 = vadd.f32 %v179, %v198
    %200 = vdwg.mxu0
    %vm201 = vcmp.gt.f32.partialorder %v199, 0.0
    %v202 = vmul.f32 %v199, 0.2
    %v203 = vsel %vm201, %v199, %v202
    %v204 = vld [vmem:[#allocation9] sm:$0xff]
    %v205 = vld [vmem:[#allocation2] sm:$0x1]
    %206 = vmatpush.xpose.msra.mxu0 0.0
    %207 = vmatpush.xpose.msra.mxu0 0.0
    %208 = vmatpush.xpose.msra.mxu0 0.0
    %209 = vmatpush.xpose.msra.mxu0 0.0
    %210 = vmatpush.xpose.msra.mxu0 0.0
    %211 = vmatpush.xpose.msra.mxu0 0.0
    %212 = vmatpush.xpose.msra.mxu0 0.0
    %213 = vmatpush.xpose.msra.mxu0 0.0
    %214 = vmatpush.xpose.msra.mxu0 0.0
    %215 = vmatpush.xpose.msra.mxu0 0.0
    %216 = vmatpush.xpose.msra.mxu0 0.0
    %217 = vmatpush.xpose.msra.mxu0 0.0
    %218 = vmatpush.xpose.msra.mxu0 0.0
    %219 = vmatpush.xpose.msra.mxu0 0.0
    %220 = vmatpush.xpose.msra.mxu0 0.0
    %221 = vmatpush.xpose.msra.mxu0 %v203
    %222 = vmatmul.f32.gmra.mxu0 %v204
    %v223 = vpop.f32.mrf.mxu0
    %v224 = vadd.f32 0.0, %v223
    %225 = vdwg.mxu0
    %227 = vset.pattern.permute.xlu0 0
    %228 = vperm.xlu0 %227, %v205
    %v229 = vpop.permute.xlu0 %228
    %v231 = vperm.slane %v229, 0
    %v232 = vadd.f32 %v224, %v231
    %v233 = vsub.f32 0.0, %v232
    %v234 = vmul.f32 %v233, 1.442695
    %v235 = vpow.pop %v234
    %v236 = vadd.f32 %v235, 1.0
    %v237 = vrcp.pop %v236
    %v238 = vmul.f32 %v236, %v237
    %v239 = vsub.f32 1.0, %v238
    %v240 = vmul.f32 %v237, %v239
    %v241 = vadd.f32 %v237, %v240
    %vm242 = vweird.f32 %v236
    %vm243 = vweird.f32 %v237
    %vm244 = vmor %vm242, %vm243
    %v245 = vsel %vm244, %v237, %v241
    %v246 = vand.u32 2147483647, %v236
    %vm247 = vcmp.eq.f32.partialorder %v246, 8.507059e+37
    %v248 = vand.u32 %v236, 2147483648
    %v249 = vor.u32 1.1754944e-38, %v248
    %v250 = vsel %vm247, %v249, %v245
    %v251 = vmul.f32 1.0, %v250
    %vm252 = vcmask 57344
    %253 = vst.msk [vmem:[#allocation11] sm:$0x1] %vm252, %v251
    // Predicated region
    $region46: #{tpu_custom_call.1} parent=1 // pred_check
      _
    $region47: #{tpu_custom_call.1} parent=1 // pred_check_branch
      %255 = sbr.rel (0) target = $region49
    $region48: #{tpu_custom_call.1} parent=1 // pred_region
      %257 = vsyncadd [#allocation5], 0
      %s259 = sshll.u32 [#allocation11], 4
      %s260 = int_to_ptr.vmem [resolvable:$true] %s259
      %s261 = sshll.u32 %s7, 4
      %s262 = int_to_ptr.hbm [resolvable:$true] %s261
      %264 = dma.vmem_to_hbm [thread:$0]  %s260, 16, %s262, [#allocation5]
    $region49: #{tpu_custom_call.1} parent=1 // pred_fallthru
      _
    // Predicated region
    $region50: #{tpu_custom_call.1} parent=1 // pred_check
      _
    $region51: #{tpu_custom_call.1} parent=1 // pred_check_branch
      %266 = sbr.rel (0) target = $region53
    $region52: #{tpu_custom_call.1} parent=1 // pred_region
      %268 = dma.done [#allocation5], 16
    $region53: #{tpu_custom_call.1} parent=1 // pred_fallthru
      _
    %269 = vsyncpa [#allocation4], 1
    %270 = vsyncpa [#allocation7], 1
    %271 = vsyncpa [#allocation10], 1
    %272 = vsyncpa [#allocation5], 1

</llo_original>
